<compile_context>
chip_gen: v6e
topology: v6e:2x2x1
jax: 0.10.0
libtpu: 0.0.40
codegen_flags: <defaults>
</compile_context>

<pallas_src>
import functools
import math

import jax
import jax.numpy as jnp
from jax.experimental import pallas as pl
from jax.experimental.pallas import tpu as pltpu


# ----------------------------- helpers -------------------------------------

def _default_vmem_limit_bytes():
    """~3/4 of physical VMEM, capped at 96 MiB (v7x -> 48 MiB, v5e/v6e -> 96 MiB)."""
    try:
        cap = int(pltpu.get_tpu_info().vmem_capacity_bytes)
        return min(cap * 3 // 4, 96 * 1024 * 1024)
    except Exception:
        return 48 * 1024 * 1024  # conservative default: fits every TPU generation


def _choose_tile(size, target):
    """Largest multiple of 128 <= target that divides `size`, else the full extent."""
    if size <= target:
        return size
    t = (target // 128) * 128
    while t >= 128:
        if size % t == 0:
            return t
        t -= 128
    return size


def _spec(block_shape, index_map, buffer_count=None):
    """BlockSpec, optionally with an explicit buffer count (falls back gracefully)."""
    if buffer_count is not None:
        try:
            return pl.BlockSpec(block_shape, index_map,
                                pipeline_mode=pl.Buffered(buffer_count))
        except (TypeError, AttributeError):
            pass  # older jax: no pipeline_mode / Buffered -> default double buffering
    return pl.BlockSpec(block_shape, index_map)


# ----------------------------- Pallas kernels -------------------------------

def qkv_proj_kernel(x_ref, wq_ref, wkt_ref, wv_ref, q_ref, kt_ref, v_ref, *, scale):
    """Q/K/V projection for one (batch, seq-tile, head).

    bf16 MXU inputs, f32 accumulation.  K is written pre-transposed as (dph, TS):
    lane-dense store, consumed by the attention kernel without any transpose.
    """
    x = x_ref[0]                                                     # (TS, H) bf16
    q = jnp.dot(x, wq_ref[0], preferred_element_type=jnp.float32)    # (TS, dph) f32
    q_ref[0, 0] = (q * scale).astype(q_ref.dtype)                    # 1/sqrt(dph) in f32
    # k^T = Wk_h^T @ x^T via a single contraction over H (no in-kernel transpose).
    kt_ref[0, 0] = jnp.einsum("dc,sc->ds", wkt_ref[0], x,
                              preferred_element_type=jnp.float32).astype(kt_ref.dtype)
    v_ref[0, 0] = jnp.dot(x, wv_ref[0],
                          preferred_element_type=jnp.float32).astype(v_ref.dtype)


def flash_attn_kernel(bias_ref, q_ref, kt_ref, v_ref, wo_ref, bo_ref, o_ref,
                      m_sc, l_sc, acc_sc, out_sc):
    """Head-batched flash attention (online softmax over the KV grid axis) plus
    head-combine + final linear at the last KV step."""
    ki = pl.program_id(2)

    @pl.when(ki == 0)
    def _init():
        m_sc[...] = jnp.full(m_sc.shape, -jnp.inf, m_sc.dtype)
        l_sc[...] = jnp.zeros(l_sc.shape, l_sc.dtype)
        acc_sc[...] = jnp.zeros(acc_sc.shape, acc_sc.dtype)

    q = q_ref[0]                       # (nh, TQ, dph) bf16, pre-scaled by 1/sqrt(dph)
    kt = kt_ref[0]                     # (nh, dph, TK) bf16 (already transposed)
    v = v_ref[0]                       # (nh, TK, dph) bf16

    # Head-batched MXU contraction; K already transposed -> plain matmul layout.
    s = jnp.einsum("hqd,hdk->hqk", q, kt,
                   preferred_element_type=jnp.float32)               # (nh, TQ, TK) f32
    s = s + bias_ref[...]                                            # (1, 1, TK) mask bias

    m_prev = m_sc[...]                                               # (nh, TQ, 1)
    m_new = jnp.maximum(m_prev, jnp.max(s, axis=-1, keepdims=True))
    alpha = jnp.exp(m_prev - m_new)
    p = jnp.exp(s - m_new)                                           # unnormalized, f32
    l_sc[...] = alpha * l_sc[...] + jnp.sum(p, axis=-1, keepdims=True)
    acc_sc[...] = alpha * acc_sc[...] + jnp.einsum(
        "hqk,hkd->hqd", p.astype(jnp.bfloat16), v,
        preferred_element_type=jnp.float32)
    m_sc[...] = m_new

    @pl.when(ki == pl.num_programs(2) - 1)
    def _finalize():
        # Exact f32 normalization (once per output tile; avoids approx-reciprocal error).
        ctx = (acc_sc[...] / l_sc[...]).astype(jnp.bfloat16)         # (nh, TQ, dph)
        num_heads = ctx.shape[0]
        # Head combine + final linear accumulated in a VMEM scratch ref so no
        # large (TQ, H) f32 value stays live across the per-head matmuls.
        out_sc[...] = jnp.zeros(out_sc.shape, out_sc.dtype)
        for h in range(num_heads):     # static, small; leading-dim slices only
            out_sc[...] += jnp.dot(ctx[h], wo_ref[h],
                                   preferred_element_type=jnp.float32)
        o_ref[0] = (out_sc[...] + bo_ref[...]).astype(o_ref.dtype)


# ----------------------------- wrapper --------------------------------------

def multi_head_attention(x, mask, params, num_heads, *,
                         vmem_limit_bytes=None,
                         q_tile_target=128, kv_tile_target=512,
                         seq_tile_target=512):
    """Forward pass of MultiHeadedAttention (self-attention, eval mode).

    x:    (B, S, H) float32 query (= memory)
    mask: (B, 1, S); nonzero marks MASKED key positions, i.e. exactly
          `scores.masked_fill_(mask.bool(), -1e18)` in the PyTorch module.
    """
    B, S, H = x.shape
    dph = H // num_heads
    if vmem_limit_bytes is None:
        vmem_limit_bytes = _default_vmem_limit_bytes()

    xb = x.astype(jnp.bfloat16)                                        # cast once
    bias = jnp.where(mask != 0, -1e18, 0.0).astype(jnp.float32)        # (B, 1, S)

    # ---- kernel 1: Q/K/V projection into head-major layout (K pre-transposed) ----
    TS = _choose_tile(S, seq_tile_target)
    nts = S // TS
    q, kt, v = pl.pallas_call(
        functools.partial(qkv_proj_kernel, scale=1.0 / math.sqrt(dph)),
        out_shape=(
            jax.ShapeDtypeStruct((B, num_heads, S, dph), jnp.bfloat16),   # q
            jax.ShapeDtypeStruct((B, num_heads, dph, S), jnp.bfloat16),   # k^T (lane-dense)
            jax.ShapeDtypeStruct((B, num_heads, S, dph), jnp.bfloat16),   # v
        ),
        grid=(B, nts, num_heads),            # h innermost: x tile DMA reused across heads
        in_specs=[
            pl.BlockSpec((1, TS, H), lambda b, si, h: (b, si, 0)),        # x seq tile
            pl.BlockSpec((1, H, dph), lambda b, si, h: (h, 0, 0)),        # Wq head slab
            pl.BlockSpec((1, dph, H), lambda b, si, h: (h, 0, 0)),        # Wk^T head slab
            pl.BlockSpec((1, H, dph), lambda b, si, h: (h, 0, 0)),        # Wv head slab
        ],
        out_specs=(
            pl.BlockSpec((1, 1, TS, dph), lambda b, si, h: (b, h, si, 0)),
            pl.BlockSpec((1, 1, dph, TS), lambda b, si, h: (b, h, 0, si)),
            pl.BlockSpec((1, 1, TS, dph), lambda b, si, h: (b, h, si, 0)),
        ),
        compiler_params=pltpu.CompilerParams(
            dimension_semantics=("parallel", "parallel", "parallel"),
            vmem_limit_bytes=vmem_limit_bytes),
    )(xb, params["wq3"], params["wkt3"], params["wv3"])

    # ---- kernel 2: flash attention (online softmax over KV tiles) + out proj ----
    TQ = _choose_tile(S, q_tile_target)
    TK = _choose_tile(S, kv_tile_target)
    nq, nkv = S // TQ, S // TK

    def attn_call(single_buffer_weights):
        bc = 1 if single_buffer_weights else None
        return pl.pallas_call(
            flash_attn_kernel,
            out_shape=jax.ShapeDtypeStruct((B, S, H), x.dtype),
            grid=(B, nq, nkv),                           # reduction (KV) axis last
            in_specs=[
                pl.BlockSpec((1, 1, TK), lambda b, qi, ki: (b, 0, ki)),                  # bias
                pl.BlockSpec((1, num_heads, TQ, dph), lambda b, qi, ki: (b, 0, qi, 0)),  # q
                pl.BlockSpec((1, num_heads, dph, TK), lambda b, qi, ki: (b, 0, 0, ki)),  # k^T
                pl.BlockSpec((1, num_heads, TK, dph), lambda b, qi, ki: (b, 0, ki, 0)),  # v
                _spec((num_heads, dph, H), lambda b, qi, ki: (0, 0, 0), bc),             # Wo
                _spec((1, H), lambda b, qi, ki: (0, 0), bc),                             # bo
            ],
            out_specs=pl.BlockSpec((1, TQ, H), lambda b, qi, ki: (b, qi, 0)),
            scratch_shapes=[
                pltpu.VMEM((num_heads, TQ, 1), jnp.float32),     # running max m
                pltpu.VMEM((num_heads, TQ, 1), jnp.float32),     # running sum l
                pltpu.VMEM((num_heads, TQ, dph), jnp.float32),   # running weighted sum
                pltpu.VMEM((TQ, H), jnp.float32),                # out-projection accumulator
            ],
            compiler_params=pltpu.CompilerParams(
                dimension_semantics=("parallel", "parallel", "arbitrary"),
                vmem_limit_bytes=vmem_limit_bytes),
        )(bias, q, kt, v, params["wo3"], params["bo"])

    try:
        out = attn_call(True)              # Buffered(1) on grid-invariant Wo / bo
        return jax.block_until_ready(out)
    except Exception:
        # Fallback for jax versions / backends that reject single-buffered specs.
        return attn_call(False)


# ----------------------------- parameter init -------------------------------

def xavier_uniform(key, out_dim, in_dim):
    bound = math.sqrt(6.0 / (in_dim + out_dim))
    return jax.random.uniform(key, (out_dim, in_dim), jnp.float32, -bound, bound)


def init_params(key, model_dim, num_heads):
    """Matches MultiHeadedAttention.init_parameters; weights pre-split per head."""
    dph = model_dim // num_heads
    ks = jax.random.split(key, 5)
    wq = xavier_uniform(ks[0], model_dim, model_dim)   # torch Linear weight (out, in)
    wk = xavier_uniform(ks[1], model_dim, model_dim)
    wv = xavier_uniform(ks[2], model_dim, model_dim)
    wo = xavier_uniform(ks[3], model_dim, model_dim)
    bound = 1.0 / math.sqrt(model_dim)                 # torch default Linear bias init
    bo = jax.random.uniform(ks[4], (model_dim,), jnp.float32, -bound, bound)

    def split_out_cols(w):                             # (out, in) -> (nh, H_in, dph)
        return w.T.reshape(model_dim, num_heads, dph).transpose(1, 0, 2)

    wk3 = split_out_cols(wk)                           # (nh, H, dph)
    return {
        "wq3": split_out_cols(wq).astype(jnp.bfloat16),            # (nh, H, dph)
        "wkt3": wk3.transpose(0, 2, 1).astype(jnp.bfloat16),       # (nh, dph, H) pre-T
        "wv3": split_out_cols(wv).astype(jnp.bfloat16),            # (nh, H, dph)
        "wo3": wo.T.reshape(num_heads, dph, model_dim).astype(jnp.bfloat16),
        "bo": bo.reshape(1, model_dim).astype(jnp.float32),
    }


# ----------------------------- pure-JAX reference ---------------------------

def reference_mha(x, mask, params, num_heads):
    """Pure-JAX reference mirroring the kernel's bf16 MXU inputs / f32 accumulation."""
    B, S, H = x.shape
    dph = H // num_heads
    scale = 1.0 / math.sqrt(dph)
    bias = jnp.where(mask != 0, -1e18, 0.0).astype(jnp.float32)    # (B, 1, S)
    xb = x.astype(jnp.bfloat16)
    q = jnp.einsum("bsc,hcd->bhsd", xb, params["wq3"],
                   preferred_element_type=jnp.float32)
    q = (q * scale).astype(jnp.bfloat16)
    kt = jnp.einsum("hdc,bsc->bhds", params["wkt3"], xb,
                    preferred_element_type=jnp.float32).astype(jnp.bfloat16)
    v = jnp.einsum("bsc,hcd->bhsd", xb, params["wv3"],
                   preferred_element_type=jnp.float32).astype(jnp.bfloat16)
    s = jnp.einsum("bhqd,bhdk->bhqk", q, kt, preferred_element_type=jnp.float32)
    s = s + bias[:, :, None, :]
    w = jax.nn.softmax(s, axis=-1)
    ctx = jnp.einsum("bhqk,bhkd->bhqd", w.astype(jnp.bfloat16), v,
                     preferred_element_type=jnp.float32).astype(jnp.bfloat16)
    out = jnp.einsum("bhqd,hdc->bqc", ctx, params["wo3"],
                     preferred_element_type=jnp.float32)
    return out + params["bo"]


# ----------------------------- main ------------------------------------------

if __name__ == "__main__":
    B, S, H, NUM_HEADS = 2, 8, 32, 4

    key = jax.random.PRNGKey(0)
    k_param, k_x = jax.random.split(key)
    params = init_params(k_param, H, NUM_HEADS)

    x = jax.random.normal(k_x, (B, S, H), jnp.float32)
    # Pad mask (nonzero = masked key); mask the last two key positions of batch 1.
    mask = jnp.zeros((B, 1, S), jnp.float32).at[1, 0, S - 2:].set(1.0)

    out = multi_head_attention(x, mask, params, NUM_HEADS)
    out = jax.block_until_ready(out)

    ref = reference_mha(x, mask, params, NUM_HEADS)
    assert out.shape == (B, S, H)
    # bf16 MXU inputs -> modest tolerance vs the pure-JAX reference.
    assert jnp.allclose(out, ref, atol=2e-2, rtol=2e-2), "mismatch vs pure-JAX reference"

    print("KERNEL_OK")
</pallas_src>

<mosaic_0001>
module attributes {stable_mosaic.version = 11 : i64} {
  func.func @qkv_proj_kernel(%arg0: i32, %arg1: i32, %arg2: i32, %arg3: memref<1x8x32xbf16, #tpu.memory_space<vmem>>, %arg4: memref<1x32x8xbf16, #tpu.memory_space<vmem>>, %arg5: memref<1x8x32xbf16, #tpu.memory_space<vmem>>, %arg6: memref<1x32x8xbf16, #tpu.memory_space<vmem>>, %arg7: memref<1x1x8x8xbf16, #tpu.memory_space<vmem>>, %arg8: memref<1x1x8x8xbf16, #tpu.memory_space<vmem>>, %arg9: memref<1x1x8x8xbf16, #tpu.memory_space<vmem>>) attributes {dimension_semantics = [#tpu.dimension_semantics<parallel>, #tpu.dimension_semantics<parallel>, #tpu.dimension_semantics<parallel>], iteration_bounds = array<i64: 2, 1, 4>, scalar_prefetch = 0 : i64, scratch_operands = 0 : i64, tpu.core_type = #tpu.core_type<tc>, window_params = [{transform_indices = @transform_0, window_bounds = array<i64: 1, 8, 32>}, {transform_indices = @transform_1, window_bounds = array<i64: 1, 32, 8>}, {transform_indices = @transform_2, window_bounds = array<i64: 1, 8, 32>}, {transform_indices = @transform_3, window_bounds = array<i64: 1, 32, 8>}, {transform_indices = @transform_4, window_bounds = array<i64: 1, 1, 8, 8>}, {transform_indices = @transform_5, window_bounds = array<i64: 1, 1, 8, 8>}, {transform_indices = @transform_6, window_bounds = array<i64: 1, 1, 8, 8>}]} {
    %c0 = arith.constant 0 : index
    %c0_0 = arith.constant 0 : index
    %c0_1 = arith.constant 0 : index
    %0 = vector.load %arg3[%c0, %c0_0, %c0_1] : memref<1x8x32xbf16, #tpu.memory_space<vmem>>, vector<1x8x32xbf16>
    %1 = vector.shape_cast %0 : vector<1x8x32xbf16> to vector<8x32xbf16>
    %c0_2 = arith.constant 0 : index
    %c0_3 = arith.constant 0 : index
    %c0_4 = arith.constant 0 : index
    %2 = vector.load %arg4[%c0_2, %c0_3, %c0_4] : memref<1x32x8xbf16, #tpu.memory_space<vmem>>, vector<1x32x8xbf16>
    %3 = vector.shape_cast %2 : vector<1x32x8xbf16> to vector<32x8xbf16>
    %cst = arith.constant dense<0.000000e+00> : vector<8x8xf32>
    %4 = tpu.matmul %1, %3, %cst {dimension_numbers = #tpu.dot_dimension_numbers<[1], [0], [0], [1], [0, 0, 1, 1], [], []>} : vector<8x32xbf16>, vector<32x8xbf16>, vector<8x8xf32> -> vector<8x8xf32>
    %cst_5 = arith.constant 0.353553385 : f32
    %5 = vector.broadcast %cst_5 : f32 to vector<8x8xf32>
    %6 = arith.mulf %4, %5 : vector<8x8xf32>
    %7 = arith.truncf %6 : vector<8x8xf32> to vector<8x8xbf16>
    %c0_6 = arith.constant 0 : index
    %c0_7 = arith.constant 0 : index
    %c0_8 = arith.constant 0 : index
    %c0_9 = arith.constant 0 : index
    %8 = vector.load %arg7[%c0_6, %c0_7, %c0_8, %c0_9] : memref<1x1x8x8xbf16, #tpu.memory_space<vmem>>, vector<1x1x8x8xbf16>
    %9 = vector.shape_cast %8 : vector<1x1x8x8xbf16> to vector<8x8xbf16>
    %10 = vector.shape_cast %7 : vector<8x8xbf16> to vector<1x1x8x8xbf16>
    tpu.vector_store %arg7[%c0_6, %c0_7, %c0_8, %c0_9], %10 {strides = array<i32>} : memref<1x1x8x8xbf16, #tpu.memory_space<vmem>>, vector<1x1x8x8xbf16>,
    %c0_10 = arith.constant 0 : index
    %c0_11 = arith.constant 0 : index
    %c0_12 = arith.constant 0 : index
    %11 = vector.load %arg5[%c0_10, %c0_11, %c0_12] : memref<1x8x32xbf16, #tpu.memory_space<vmem>>, vector<1x8x32xbf16>
    %12 = vector.shape_cast %11 : vector<1x8x32xbf16> to vector<8x32xbf16>
    "tpu.trace_start"() <{level = 10 : i32, message = "dc,sc->ds"}> : () -> ()
    %cst_13 = arith.constant dense<0.000000e+00> : vector<8x8xf32>
    %13 = tpu.matmul %12, %1, %cst_13 {dimension_numbers = #tpu.dot_dimension_numbers<[1], [1], [0], [0], [0, 0, 1, 0], [], []>} : vector<8x32xbf16>, vector<8x32xbf16>, vector<8x8xf32> -> vector<8x8xf32>
    "tpu.trace_stop"() : () -> ()
    %14 = arith.truncf %13 : vector<8x8xf32> to vector<8x8xbf16>
    %c0_14 = arith.constant 0 : index
    %c0_15 = arith.constant 0 : index
    %c0_16 = arith.constant 0 : index
    %c0_17 = arith.constant 0 : index
    %15 = vector.load %arg8[%c0_14, %c0_15, %c0_16, %c0_17] : memref<1x1x8x8xbf16, #tpu.memory_space<vmem>>, vector<1x1x8x8xbf16>
    %16 = vector.shape_cast %15 : vector<1x1x8x8xbf16> to vector<8x8xbf16>
    %17 = vector.shape_cast %14 : vector<8x8xbf16> to vector<1x1x8x8xbf16>
    tpu.vector_store %arg8[%c0_14, %c0_15, %c0_16, %c0_17], %17 {strides = array<i32>} : memref<1x1x8x8xbf16, #tpu.memory_space<vmem>>, vector<1x1x8x8xbf16>,
    %c0_18 = arith.constant 0 : index
    %c0_19 = arith.constant 0 : index
    %c0_20 = arith.constant 0 : index
    %18 = vector.load %arg6[%c0_18, %c0_19, %c0_20] : memref<1x32x8xbf16, #tpu.memory_space<vmem>>, vector<1x32x8xbf16>
    %19 = vector.shape_cast %18 : vector<1x32x8xbf16> to vector<32x8xbf16>
    %cst_21 = arith.constant dense<0.000000e+00> : vector<8x8xf32>
    %20 = tpu.matmul %1, %19, %cst_21 {dimension_numbers = #tpu.dot_dimension_numbers<[1], [0], [0], [1], [0, 0, 1, 1], [], []>} : vector<8x32xbf16>, vector<32x8xbf16>, vector<8x8xf32> -> vector<8x8xf32>
    %21 = arith.truncf %20 : vector<8x8xf32> to vector<8x8xbf16>
    %c0_22 = arith.constant 0 : index
    %c0_23 = arith.constant 0 : index
    %c0_24 = arith.constant 0 : index
    %c0_25 = arith.constant 0 : index
    %22 = vector.load %arg9[%c0_22, %c0_23, %c0_24, %c0_25] : memref<1x1x8x8xbf16, #tpu.memory_space<vmem>>, vector<1x1x8x8xbf16>
    %23 = vector.shape_cast %22 : vector<1x1x8x8xbf16> to vector<8x8xbf16>
    %24 = vector.shape_cast %21 : vector<8x8xbf16> to vector<1x1x8x8xbf16>
    tpu.vector_store %arg9[%c0_22, %c0_23, %c0_24, %c0_25], %24 {strides = array<i32>} : memref<1x1x8x8xbf16, #tpu.memory_space<vmem>>, vector<1x1x8x8xbf16>,
    return
  }
  func.func @transform_0(%arg0: i32, %arg1: i32, %arg2: i32) -> (i32, i32, i32) {
    %c0_i32 = arith.constant 0 : i32
    %c0_i32_0 = arith.constant 0 : i32
    return %arg0, %arg1, %c0_i32 : i32, i32, i32
  }
  func.func @transform_1(%arg0: i32, %arg1: i32, %arg2: i32) -> (i32, i32, i32) {
    %c0_i32 = arith.constant 0 : i32
    %c0_i32_0 = arith.constant 0 : i32
    %c0_i32_1 = arith.constant 0 : i32
    return %arg2, %c0_i32, %c0_i32_0 : i32, i32, i32
  }
  func.func @transform_2(%arg0: i32, %arg1: i32, %arg2: i32) -> (i32, i32, i32) {
    %c0_i32 = arith.constant 0 : i32
    %c0_i32_0 = arith.constant 0 : i32
    %c0_i32_1 = arith.constant 0 : i32
    return %arg2, %c0_i32, %c0_i32_0 : i32, i32, i32
  }
  func.func @transform_3(%arg0: i32, %arg1: i32, %arg2: i32) -> (i32, i32, i32) {
    %c0_i32 = arith.constant 0 : i32
    %c0_i32_0 = arith.constant 0 : i32
    %c0_i32_1 = arith.constant 0 : i32
    return %arg2, %c0_i32, %c0_i32_0 : i32, i32, i32
  }
  func.func @transform_4(%arg0: i32, %arg1: i32, %arg2: i32) -> (i32, i32, i32, i32) {
    %c0_i32 = arith.constant 0 : i32
    %c0_i32_0 = arith.constant 0 : i32
    return %arg0, %arg2, %arg1, %c0_i32 : i32, i32, i32, i32
  }
  func.func @transform_5(%arg0: i32, %arg1: i32, %arg2: i32) -> (i32, i32, i32, i32) {
    %c0_i32 = arith.constant 0 : i32
    %c0_i32_0 = arith.constant 0 : i32
    return %arg0, %arg2, %c0_i32, %arg1 : i32, i32, i32, i32
  }
  func.func @transform_6(%arg0: i32, %arg1: i32, %arg2: i32) -> (i32, i32, i32, i32) {
    %c0_i32 = arith.constant 0 : i32
    %c0_i32_0 = arith.constant 0 : i32
    return %arg0, %arg2, %arg1, %c0_i32 : i32, i32, i32, i32
  }
}

</mosaic_0001>

<llo_original>
// kernel: tpu_custom_call.1
$region0: #{tpu_custom_call.1}
  #allocation0 [shape = 'u32[]', space=smem, size = 0x4, offset = 0x4, fixed_abs, tag = 'smem constant byte address 0x4 - core index']
  #allocation1 [shape = 'u32[144,128]{1,0:T(1,128)}', space=vmem, size = 0x12000, scoped, tag = 'internal scratch']
  %s0 = inlined_call_operand.vmem [shape: bf16[2,8,32], index: 0, kind: input, shape index: {}]
  %s1 = inlined_call_operand.vmem [shape: bf16[4,32,8], index: 1, kind: input, shape index: {}]
  %s2 = inlined_call_operand.vmem [shape: bf16[4,8,32], index: 2, kind: input, shape index: {}]
  %s3 = inlined_call_operand.vmem [shape: bf16[4,32,8], index: 3, kind: input, shape index: {}]
  %s4 = inlined_call_operand.hbm [shape: bf16[2,4,8,8], index: 4, kind: output, shape index: {0}]
  %s5 = inlined_call_operand.hbm [shape: bf16[2,4,8,8], index: 5, kind: output, shape index: {1}]
  %s6 = inlined_call_operand.hbm [shape: bf16[2,4,8,8], index: 6, kind: output, shape index: {2}]
  %7 = xla_tuple %s4, %s5, %s6
  %s8 = sld [smem:[#allocation0]]
  $region65: #{tpu_custom_call.1} parent=0
    _
  %s10 = ssub.s32 1, %s8
  %s11 = scalar_select 0, %s10, %s8
  $region1: #{tpu_custom_call.1} parent=0
    #allocation2 [shape = 'u8[4096]{0}', space=vmem, size = 0x1000, scoped, tag = 'output window, operand 0']
    #allocation3 [shape = 's32[2]{0}', space=sflag, size = 0x8, scoped, tag = 'scoped memory for tpu_custom_call.1']
    #allocation4 [shape = 'u8[4096]{0}', space=vmem, size = 0x1000, scoped, tag = 'output window, operand 1']
    #allocation5 [shape = 's32[2]{0}', space=sflag, size = 0x8, scoped, tag = 'scoped memory for tpu_custom_call.1']
    #allocation6 [shape = 'u8[4096]{0}', space=vmem, size = 0x1000, scoped, tag = 'output window, operand 2']
    %12 = vsyncpa [#allocation3], 0
    %s13 = scalar_lea.sflag [#allocation3], 1
    %14 = vsyncpa %s13, 0
    %15 = vsyncpa [#allocation5], 0
    %s16 = scalar_lea.sflag [#allocation5], 1
    %17 = vsyncpa %s16, 0
    loop: start=0, step=1, limit=10
    $region2: #{tpu_custom_call.1} parent=1 // loop_pre_header
      _
    $region3: #{tpu_custom_call.1} parent=1 // loop_header
      %s19 = sphi 0, %s23
      %p20 = scmp.ge.s32.totalorder %s19, 10
      %s26 = sphi 0, %s45
      %s27 = sphi 0, %s41
      %s28 = sphi 0, %s37
      %s29 = sphi 0, %s26
      %s30 = sphi 0, %s27
      %s31 = sphi 0, %s28
      %s32 = sphi 0, %s29
      %s33 = sphi 0, %s30
      %s34 = sphi 0, %s31
      %s50 = sphi 0, %s52
      %s53 = sphi 0, %s50
      %s54 = sphi 0, %s53
      %s70 = sphi 0, %s54
      %s76 = sphi 0, %s78
      %s79 = sphi 0, %s76
      %s80 = sphi 0, %s79
      %s96 = sphi 0, %s80
      %s102 = sphi 0, %s104
      %s105 = sphi 0, %s102
      %s106 = sphi 0, %s105
      %s122 = sphi 0, %s106
      %s128 = sphi 0, %s130
      %s131 = sphi 0, %s128
      %s132 = sphi 0, %s131
      %s148 = sphi 0, %s132
      %s158 = sphi 0, %s160
      %s161 = sphi 0, %s158
      %s162 = sphi 0, %s161
      %s178 = sphi 0, %s162
      %s188 = sphi 0, %s190
      %s191 = sphi 0, %s188
      %s192 = sphi 0, %s191
      %s208 = sphi 0, %s192
      %s218 = sphi 0, %s220
      %s221 = sphi 0, %s218
      %s222 = sphi 0, %s221
      %s238 = sphi 0, %s222
    $region4: #{tpu_custom_call.1} parent=1 // loop_header_branch
      %22 = sbr.rel (%p20) target = $region8
    $region5: #{tpu_custom_call.1} parent=1 // loop_body
      %s24 = ssub.s32 %s19, 1
      %s25 = ssub.s32 %s19, 2
      %s35 = sadd.s32 1, %s28
      %p36 = scmp.ge.s32.totalorder %s35, 4
      %s37 = scalar_select %p36, 0, %s35
      %s38 = sadd.s32 1, %s27
      %s39 = scalar_select %p36, %s38, %s27
      %p40 = scmp.ge.s32.totalorder %s39, 1
      %s41 = scalar_select %p40, 0, %s39
      %s42 = sadd.s32 1, %s26
      %s43 = scalar_select %p40, %s42, %s26
      %p44 = scmp.ge.s32.totalorder %s43, 2
      %s45 = scalar_select %p44, 0, %s43
      %s46 = ssub.s32 %s26, %s45
      %s47 = ssub.s32 %s27, %s41
      %s48 = sor.u32 %s46, %s47
      %p49 = scmp.eq.s32.totalorder %s48, 0
      %s51 = sadd.s32 %s50, 1
      %s52 = scalar_select %p49, %s50, %s51
      %p55 = pneg %p49
      %p56 = scmp.eq.s32.totalorder %s19, 7
      %p57 = por %p55, %p56
      %p58 = scmp.ne.s32.totalorder %s50, %s53
      %p59 = scmp.eq.s32.totalorder %s19, 0
      %p60 = por %p58, %p59
      %p61 = scmp.ne.s32.totalorder %s50, %s53
      %p62 = scmp.eq.s32.totalorder %s24, 7
      %p63 = por %p61, %p62
      %p64 = scmp.ne.s32.totalorder %s53, %s54
      %p65 = scmp.eq.s32.totalorder %s24, 0
      %p66 = por %p64, %p65
      %p67 = scmp.ne.s32.totalorder %s53, %s54
      %p68 = scmp.eq.s32.totalorder %s25, 7
      %p69 = por %p67, %p68
      %p71 = scmp.ne.s32.totalorder %s54, %s70
      %p72 = scmp.eq.s32.totalorder %s25, 0
      %p73 = por %p71, %p72
      %s74 = ssub.s32 %s28, %s37
      %p75 = scmp.eq.s32.totalorder %s74, 0
      %s77 = sadd.s32 %s76, 1
      %s78 = scalar_select %p75, %s76, %s77
      %p81 = pneg %p75
      %p82 = scmp.eq.s32.totalorder %s19, 7
      %p83 = por %p81, %p82
      %p84 = scmp.ne.s32.totalorder %s76, %s79
      %p85 = scmp.eq.s32.totalorder %s19, 0
      %p86 = por %p84, %p85
      %p87 = scmp.ne.s32.totalorder %s76, %s79
      %p88 = scmp.eq.s32.totalorder %s24, 7
      %p89 = por %p87, %p88
      %p90 = scmp.ne.s32.totalorder %s79, %s80
      %p91 = scmp.eq.s32.totalorder %s24, 0
      %p92 = por %p90, %p91
      %p93 = scmp.ne.s32.totalorder %s79, %s80
      %p94 = scmp.eq.s32.totalorder %s25, 7
      %p95 = por %p93, %p94
      %p97 = scmp.ne.s32.totalorder %s80, %s96
      %p98 = scmp.eq.s32.totalorder %s25, 0
      %p99 = por %p97, %p98
      %s100 = ssub.s32 %s28, %s37
      %p101 = scmp.eq.s32.totalorder %s100, 0
      %s103 = sadd.s32 %s102, 1
      %s104 = scalar_select %p101, %s102, %s103
      %p107 = pneg %p101
      %p108 = scmp.eq.s32.totalorder %s19, 7
      %p109 = por %p107, %p108
      %p110 = scmp.ne.s32.totalorder %s102, %s105
      %p111 = scmp.eq.s32.totalorder %s19, 0
      %p112 = por %p110, %p111
      %p113 = scmp.ne.s32.totalorder %s102, %s105
      %p114 = scmp.eq.s32.totalorder %s24, 7
      %p115 = por %p113, %p114
      %p116 = scmp.ne.s32.totalorder %s105, %s106
      %p117 = scmp.eq.s32.totalorder %s24, 0
      %p118 = por %p116, %p117
      %p119 = scmp.ne.s32.totalorder %s105, %s106
      %p120 = scmp.eq.s32.totalorder %s25, 7
      %p121 = por %p119, %p120
      %p123 = scmp.ne.s32.totalorder %s106, %s122
      %p124 = scmp.eq.s32.totalorder %s25, 0
      %p125 = por %p123, %p124
      %s126 = ssub.s32 %s28, %s37
      %p127 = scmp.eq.s32.totalorder %s126, 0
      %s129 = sadd.s32 %s128, 1
      %s130 = scalar_select %p127, %s128, %s129
      %p133 = pneg %p127
      %p134 = scmp.eq.s32.totalorder %s19, 7
      %p135 = por %p133, %p134
      %p136 = scmp.ne.s32.totalorder %s128, %s131
      %p137 = scmp.eq.s32.totalorder %s19, 0
      %p138 = por %p136, %p137
      %p139 = scmp.ne.s32.totalorder %s128, %s131
      %p140 = scmp.eq.s32.totalorder %s24, 7
      %p141 = por %p139, %p140
      %p142 = scmp.ne.s32.totalorder %s131, %s132
      %p143 = scmp.eq.s32.totalorder %s24, 0
      %p144 = por %p142, %p143
      %p145 = scmp.ne.s32.totalorder %s131, %s132
      %p146 = scmp.eq.s32.totalorder %s25, 7
      %p147 = por %p145, %p146
      %p149 = scmp.ne.s32.totalorder %s132, %s148
      %p150 = scmp.eq.s32.totalorder %s25, 0
      %p151 = por %p149, %p150
      %s152 = ssub.s32 %s26, %s45
      %s153 = ssub.s32 %s28, %s37
      %s154 = sor.u32 %s152, %s153
      %s155 = ssub.s32 %s27, %s41
      %s156 = sor.u32 %s154, %s155
      %p157 = scmp.eq.s32.totalorder %s156, 0
      %s159 = sadd.s32 %s158, 1
      %s160 = scalar_select %p157, %s158, %s159
      %p163 = pneg %p157
      %p164 = scmp.eq.s32.totalorder %s19, 7
      %p165 = por %p163, %p164
      %p166 = scmp.ne.s32.totalorder %s158, %s161
      %p167 = scmp.eq.s32.totalorder %s19, 0
      %p168 = por %p166, %p167
      %p169 = scmp.ne.s32.totalorder %s158, %s161
      %p170 = scmp.eq.s32.totalorder %s24, 7
      %p171 = por %p169, %p170
      %p172 = scmp.ne.s32.totalorder %s161, %s162
      %p173 = scmp.eq.s32.totalorder %s24, 0
      %p174 = por %p172, %p173
      %p175 = scmp.ne.s32.totalorder %s161, %s162
      %p176 = scmp.eq.s32.totalorder %s25, 7
      %p177 = por %p175, %p176
      %p179 = scmp.ne.s32.totalorder %s162, %s178
      %p180 = scmp.eq.s32.totalorder %s25, 0
      %p181 = por %p179, %p180
      %s182 = ssub.s32 %s26, %s45
      %s183 = ssub.s32 %s28, %s37
      %s184 = sor.u32 %s182, %s183
      %s185 = ssub.s32 %s27, %s41
      %s186 = sor.u32 %s184, %s185
      %p187 = scmp.eq.s32.totalorder %s186, 0
      %s189 = sadd.s32 %s188, 1
      %s190 = scalar_select %p187, %s188, %s189
      %p193 = pneg %p187
      %p194 = scmp.eq.s32.totalorder %s19, 7
      %p195 = por %p193, %p194
      %p196 = scmp.ne.s32.totalorder %s188, %s191
      %p197 = scmp.eq.s32.totalorder %s19, 0
      %p198 = por %p196, %p197
      %p199 = scmp.ne.s32.totalorder %s188, %s191
      %p200 = scmp.eq.s32.totalorder %s24, 7
      %p201 = por %p199, %p200
      %p202 = scmp.ne.s32.totalorder %s191, %s192
      %p203 = scmp.eq.s32.totalorder %s24, 0
      %p204 = por %p202, %p203
      %p205 = scmp.ne.s32.totalorder %s191, %s192
      %p206 = scmp.eq.s32.totalorder %s25, 7
      %p207 = por %p205, %p206
      %p209 = scmp.ne.s32.totalorder %s192, %s208
      %p210 = scmp.eq.s32.totalorder %s25, 0
      %p211 = por %p209, %p210
      %s212 = ssub.s32 %s26, %s45
      %s213 = ssub.s32 %s28, %s37
      %s214 = sor.u32 %s212, %s213
      %s215 = ssub.s32 %s27, %s41
      %s216 = sor.u32 %s214, %s215
      %p217 = scmp.eq.s32.totalorder %s216, 0
      %s219 = sadd.s32 %s218, 1
      %s220 = scalar_select %p217, %s218, %s219
      %p223 = pneg %p217
      %p224 = scmp.eq.s32.totalorder %s19, 7
      %p225 = por %p223, %p224
      %p226 = scmp.ne.s32.totalorder %s218, %s221
      %p227 = scmp.eq.s32.totalorder %s19, 0
      %p228 = por %p226, %p227
      %p229 = scmp.ne.s32.totalorder %s218, %s221
      %p230 = scmp.eq.s32.totalorder %s24, 7
      %p231 = por %p229, %p230
      %p232 = scmp.ne.s32.totalorder %s221, %s222
      %p233 = scmp.eq.s32.totalorder %s24, 0
      %p234 = por %p232, %p233
      %p235 = scmp.ne.s32.totalorder %s221, %s222
      %p236 = scmp.eq.s32.totalorder %s25, 7
      %p237 = por %p235, %p236
      %p239 = scmp.ne.s32.totalorder %s222, %s238
      %p240 = scmp.eq.s32.totalorder %s25, 0
      %p241 = por %p239, %p240
      %p242 = scmp.le.s32.totalorder 1, %s19
      %p243 = scmp.lt.s32.totalorder %s19, 9
      %p244 = pnand %p242, %p243
      %p245 = pneg %p244
      // Predicated region
      $region9: #{tpu_custom_call.1} parent=5 // pred_check
        _
      $region10: #{tpu_custom_call.1} parent=5 // pred_check_branch
        %247 = sbr.rel (%p244) target = $region12
      $region11: #{tpu_custom_call.1} parent=5 // pred_region
        %s248 = ssub.s32 %s19, 1
      $region12: #{tpu_custom_call.1} parent=5 // pred_fallthru
        _
      %p249 = scmp.lt.s32.totalorder %s19, 8
      // Predicated region
      $region13: #{tpu_custom_call.1} parent=5 // pred_check
        %p250 = pneg %p249
      $region14: #{tpu_custom_call.1} parent=5 // pred_check_branch
        %252 = sbr.rel (%p250) target = $region16
      $region15: #{tpu_custom_call.1} parent=5 // pred_region
        // Predicated region
        $region17: #{tpu_custom_call.1} parent=15 // pred_check
          %p253 = pneg %p60
        $region18: #{tpu_custom_call.1} parent=15 // pred_check_branch
          %255 = sbr.rel (%p253) target = $region20
        $region19: #{tpu_custom_call.1} parent=15 // pred_region
          %p256 = scmp.lt.s32.totalorder %s26, 1
          %s257 = scalar_select %p256, %s26, 1
          %p258 = scmp.lt.s32.totalorder %s27, 0
          %s259 = scalar_select %p258, %s27, 0
          %s260 = sadd.s32 %s259, %s257
          %s261 = smul.addr %s260, 4
          %s262 = scalar_lea.vmem %s0, %s261
        $region20: #{tpu_custom_call.1} parent=15 // pred_fallthru
          _
        // Predicated region
        $region21: #{tpu_custom_call.1} parent=15 // pred_check
          %p263 = pneg %p86
        $region22: #{tpu_custom_call.1} parent=15 // pred_check_branch
          %265 = sbr.rel (%p263) target = $region24
        $region23: #{tpu_custom_call.1} parent=15 // pred_region
          %p266 = scmp.lt.s32.totalorder %s28, 3
          %s267 = scalar_select %p266, %s28, 3
          %s268 = smul.addr %s267, 4
          %s269 = smul.addr %s268, 4
          %s270 = scalar_lea.vmem %s1, %s269
        $region24: #{tpu_custom_call.1} parent=15 // pred_fallthru
          _
        // Predicated region
        $region25: #{tpu_custom_call.1} parent=15 // pred_check
          %p271 = pneg %p112
        $region26: #{tpu_custom_call.1} parent=15 // pred_check_branch
          %273 = sbr.rel (%p271) target = $region28
        $region27: #{tpu_custom_call.1} parent=15 // pred_region
          %p274 = scmp.lt.s32.totalorder %s28, 3
          %s275 = scalar_select %p274, %s28, 3
          %s276 = smul.addr %s275, 4
          %s277 = scalar_lea.vmem %s2, %s276
        $region28: #{tpu_custom_call.1} parent=15 // pred_fallthru
          _
        // Predicated region
        $region29: #{tpu_custom_call.1} parent=15 // pred_check
          %p278 = pneg %p138
        $region30: #{tpu_custom_call.1} parent=15 // pred_check_branch
          %280 = sbr.rel (%p278) target = $region32
        $region31: #{tpu_custom_call.1} parent=15 // pred_region
          %p281 = scmp.lt.s32.totalorder %s28, 3
          %s282 = scalar_select %p281, %s28, 3
          %s283 = smul.addr %s282, 4
          %s284 = smul.addr %s283, 4
          %s285 = scalar_lea.vmem %s3, %s284
        $region32: #{tpu_custom_call.1} parent=15 // pred_fallthru
          _
      $region16: #{tpu_custom_call.1} parent=5 // pred_fallthru
        _
      %p286 = scmp.le.s32.totalorder 1, %s19
      %p287 = scmp.lt.s32.totalorder %s19, 9
      %p288 = pnand %p286, %p287
      %p289 = pneg %p288
      // Predicated region
      $region33: #{tpu_custom_call.1} parent=5 // pred_check
        _
      $region34: #{tpu_custom_call.1} parent=5 // pred_check_branch
        %291 = sbr.rel (%p288) target = $region36
      $region35: #{tpu_custom_call.1} parent=5 // pred_region
        %s292 = ssub.s32 %s19, 1
        %p293 = scmp.lt.s32.totalorder %s29, 1
        %s294 = scalar_select %p293, %s29, 1
        %p295 = scmp.lt.s32.totalorder %s30, 0
        %s296 = scalar_select %p295, %s30, 0
        %s297 = sadd.s32 %s296, %s294
        %s298 = smul.addr %s297, 4
        %s299 = scalar_lea.vmem %s0, %s298
        %p300 = pneg %p66
        %p301 = pneg %p63
        %p302 = scmp.lt.s32.totalorder %s31, 3
        %s303 = scalar_select %p302, %s31, 3
        %s304 = smul.addr %s303, 4
        %s305 = smul.addr %s304, 4
        %s306 = scalar_lea.vmem %s1, %s305
        %p307 = pneg %p92
        %p308 = pneg %p89
        %p309 = scmp.lt.s32.totalorder %s31, 3
        %s310 = scalar_select %p309, %s31, 3
        %s311 = smul.addr %s310, 4
        %s312 = scalar_lea.vmem %s2, %s311
        %p313 = pneg %p118
        %p314 = pneg %p115
        %p315 = scmp.lt.s32.totalorder %s31, 3
        %s316 = scalar_select %p315, %s31, 3
        %s317 = smul.addr %s316, 4
        %s318 = smul.addr %s317, 4
        %s319 = scalar_lea.vmem %s3, %s318
        %p320 = pneg %p144
        %p321 = pneg %p141
        %p322 = pneg %p174
        %p323 = pneg %p171
        %s324 = sand.u32 %s161, 1
        %s325 = scalar_lea.sflag [#allocation3], %s324
        %s326 = sand.u32 %s161, 1
        %s327 = smul.addr %s326, 4
        %s328 = scalar_lea.vmem [#allocation2], %s327
        %p329 = pneg %p204
        %p330 = pneg %p201
        %s331 = sand.u32 %s24, 1
        %s332 = scalar_lea.sflag [#allocation5], %s331
        %s333 = sand.u32 %s191, 1
        %s334 = smul.addr %s333, 4
        %s335 = scalar_lea.vmem [#allocation4], %s334
        %p336 = pneg %p234
        %p337 = pneg %p231
        %s338 = sand.u32 %s24, 1
        %s339 = scalar_lea.sflag [#allocation5], %s338
        %s340 = sand.u32 %s221, 1
        %s341 = smul.addr %s340, 4
        %s342 = scalar_lea.vmem [#allocation6], %s341
        %p343 = scmp.lt.s32.totalorder %s29, 1
        %s344 = scalar_select %p343, %s29, 1
        %p345 = scmp.lt.s32.totalorder %s30, 0
        %s346 = scalar_select %p345, %s30, 0
        %s347 = sadd.s32 %s346, %s344
        %s348 = smul.addr %s347, 4
        %s349 = scalar_lea.vmem %s0, %s348
        %p350 = scmp.lt.s32.totalorder %s31, 3
        %s351 = scalar_select %p350, %s31, 3
        %s352 = smul.addr %s351, 4
        %s353 = smul.addr %s352, 4
        %s354 = scalar_lea.vmem %s1, %s353
        %p355 = scmp.lt.s32.totalorder %s31, 3
        %s356 = scalar_select %p355, %s31, 3
        %s357 = smul.addr %s356, 4
        %s358 = scalar_lea.vmem %s2, %s357
        %p359 = scmp.lt.s32.totalorder %s31, 3
        %s360 = scalar_select %p359, %s31, 3
        %s361 = smul.addr %s360, 4
        %s362 = smul.addr %s361, 4
        %s363 = scalar_lea.vmem %s3, %s362
        %v365 = vld [vmem:[%s349] sm:$0xf]
        %v366 = vld [vmem:[%s354] sm:$0xf]
        %v367 = vld [vmem:[%s354 + $0x4] sm:$0xf]
        %v368 = vld [vmem:[%s354 + $0x8] sm:$0xf]
        %v369 = vld [vmem:[%s354 + $0xc] sm:$0xf]
        %v374 = vunpack.c.l.b16 %v366
        %v375 = vunpack.c.l.b16 %v367
        %v376 = vunpack.c.l.b16 %v368
        %v377 = vunpack.c.l.b16 %v369
        %v378 = vpack.c.b16 %v375, %v374
        %v379 = vpack.c.b16 %v377, %v376
        %vm382 = vcmask 261120
        %v384 = vsel %vm382, %v365, 0
        %386 = vmatprep.subr.bf16.mxu0 0
        %387 = vmatpush1.bf16.msra.mxu0 0
        %388 = vmatprep.subr.bf16.mxu0 0
        %389 = vmatpush1.bf16.msra.mxu0 0
        %390 = vmatprep.subr.bf16.mxu0 0
        %391 = vmatpush1.bf16.msra.mxu0 0
        %392 = vmatprep.subr.bf16.mxu0 0
        %393 = vmatpush1.bf16.msra.mxu0 0
        %394 = vmatprep.subr.bf16.mxu0 0
        %395 = vmatpush1.bf16.msra.mxu0 0
        %396 = vmatprep.subr.bf16.mxu0 0
        %397 = vmatpush1.bf16.msra.mxu0 0
        %398 = vmatprep.subr.bf16.mxu0 0
        %399 = vmatpush1.bf16.msra.mxu0 %v379
        %400 = vmatprep.subr.bf16.mxu0 0
        %401 = vmatpush1.bf16.msra.mxu0 %v378
        %402 = vmatprep.subr.bf16.mxu0 0
        %403 = vmatpush2.bf16.msra.mxu0 0
        %404 = vmatprep.subr.bf16.mxu0 0
        %405 = vmatpush2.bf16.msra.mxu0 0
        %406 = vmatprep.subr.bf16.mxu0 0
        %407 = vmatpush2.bf16.msra.mxu0 0
        %408 = vmatprep.subr.bf16.mxu0 0
        %409 = vmatpush2.bf16.msra.mxu0 0
        %410 = vmatprep.subr.bf16.mxu0 0
        %411 = vmatpush2.bf16.msra.mxu0 0
        %412 = vmatprep.subr.bf16.mxu0 0
        %413 = vmatpush2.bf16.msra.mxu0 0
        %414 = vmatprep.subr.bf16.mxu0 0
        %415 = vmatpush2.bf16.msra.mxu0 0
        %416 = vmatprep.subr.bf16.mxu0 0
        %417 = vmatpush2.bf16.msra.mxu0 0
        %418 = vmatprep.mubr.bf16.mxu0 0
        %419 = vmatmul.mubr.bf16.gmra.mxu0 %v384
        %v420 = vpop.f32.mrf.mxu0
        %v421 = vadd.f32 0.0, %v420
        %v422 = vpop.f32.mrf.mxu0
        %v423 = vpop.f32.mrf.mxu0
        %v424 = vpop.f32.mrf.mxu0
        %425 = vdwg.mxu0
        %v426 = vmul.f32 %v421, 0.35355338
        %v427 = vpack.c.bf16 %v426, %v426
        %vm428 = vcmask 60416
        %429 = vst.msk [vmem:[%s328] sm:$0xf] %vm428, %v427
        %v430 = vld [vmem:[%s358] sm:$0xf]
        %v432 = vsel %vm382, %v430, 0
        %434 = vmatprep.subr.bf16.mxu0 0
        %435 = vmatpush1.bf16.xpose.msra.mxu0 0
        %436 = vmatprep.subr.bf16.mxu0 0
        %437 = vmatpush1.bf16.xpose.msra.mxu0 0
        %438 = vmatprep.subr.bf16.mxu0 0
        %439 = vmatpush1.bf16.xpose.msra.mxu0 0
        %440 = vmatprep.subr.bf16.mxu0 0
        %441 = vmatpush1.bf16.xpose.msra.mxu0 0
        %442 = vmatprep.subr.bf16.mxu0 0
        %443 = vmatpush1.bf16.xpose.msra.mxu0 0
        %444 = vmatprep.subr.bf16.mxu0 0
        %445 = vmatpush1.bf16.xpose.msra.mxu0 0
        %446 = vmatprep.subr.bf16.mxu0 0
        %447 = vmatpush1.bf16.xpose.msra.mxu0 0
        %448 = vmatprep.subr.bf16.mxu0 0
        %449 = vmatpush1.bf16.xpose.msra.mxu0 %v384
        %450 = vmatprep.subr.bf16.mxu0 0
        %451 = vmatpush2.bf16.xpose.msra.mxu0 0
        %452 = vmatprep.subr.bf16.mxu0 0
        %453 = vmatpush2.bf16.xpose.msra.mxu0 0
        %454 = vmatprep.subr.bf16.mxu0 0
        %455 = vmatpush2.bf16.xpose.msra.mxu0 0
        %456 = vmatprep.subr.bf16.mxu0 0
        %457 = vmatpush2.bf16.xpose.msra.mxu0 0
        %458 = vmatprep.subr.bf16.mxu0 0
        %459 = vmatpush2.bf16.xpose.msra.mxu0 0
        %460 = vmatprep.subr.bf16.mxu0 0
        %461 = vmatpush2.bf16.xpose.msra.mxu0 0
        %462 = vmatprep.subr.bf16.mxu0 0
        %463 = vmatpush2.bf16.xpose.msra.mxu0 0
        %464 = vmatprep.subr.bf16.mxu0 0
        %465 = vmatpush2.bf16.xpose.msra.mxu0 0
        %466 = vmatprep.mubr.bf16.mxu0 0
        %467 = vmatmul.mubr.bf16.gmra.mxu0 %v432
        %v468 = vpop.f32.mrf.mxu0
        %v469 = vadd.f32 0.0, %v468
        %v470 = vpop.f32.mrf.mxu0
        %v471 = vpop.f32.mrf.mxu0
        %v472 = vpop.f32.mrf.mxu0
        %473 = vdwg.mxu0
        %v474 = vpack.c.bf16 %v469, %v469
        %475 = vst.msk [vmem:[%s335] sm:$0xf] %vm428, %v474
        %v476 = vld [vmem:[%s363] sm:$0xf]
        %v477 = vld [vmem:[%s363 + $0x4] sm:$0xf]
        %v478 = vld [vmem:[%s363 + $0x8] sm:$0xf]
        %v479 = vld [vmem:[%s363 + $0xc] sm:$0xf]
        %v484 = vunpack.c.l.b16 %v476
        %v485 = vunpack.c.l.b16 %v477
        %v486 = vunpack.c.l.b16 %v478
        %v487 = vunpack.c.l.b16 %v479
        %v488 = vpack.c.b16 %v485, %v484
        %v489 = vpack.c.b16 %v487, %v486
        %492 = vmatprep.subr.bf16.mxu0 0
        %493 = vmatpush1.bf16.msra.mxu0 0
        %494 = vmatprep.subr.bf16.mxu0 0
        %495 = vmatpush1.bf16.msra.mxu0 0
        %496 = vmatprep.subr.bf16.mxu0 0
        %497 = vmatpush1.bf16.msra.mxu0 0
        %498 = vmatprep.subr.bf16.mxu0 0
        %499 = vmatpush1.bf16.msra.mxu0 0
        %500 = vmatprep.subr.bf16.mxu0 0
        %501 = vmatpush1.bf16.msra.mxu0 0
        %502 = vmatprep.subr.bf16.mxu0 0
        %503 = vmatpush1.bf16.msra.mxu0 0
        %504 = vmatprep.subr.bf16.mxu0 0
        %505 = vmatpush1.bf16.msra.mxu0 %v489
        %506 = vmatprep.subr.bf16.mxu0 0
        %507 = vmatpush1.bf16.msra.mxu0 %v488
        %508 = vmatprep.subr.bf16.mxu0 0
        %509 = vmatpush2.bf16.msra.mxu0 0
        %510 = vmatprep.subr.bf16.mxu0 0
        %511 = vmatpush2.bf16.msra.mxu0 0
        %512 = vmatprep.subr.bf16.mxu0 0
        %513 = vmatpush2.bf16.msra.mxu0 0
        %514 = vmatprep.subr.bf16.mxu0 0
        %515 = vmatpush2.bf16.msra.mxu0 0
        %516 = vmatprep.subr.bf16.mxu0 0
        %517 = vmatpush2.bf16.msra.mxu0 0
        %518 = vmatprep.subr.bf16.mxu0 0
        %519 = vmatpush2.bf16.msra.mxu0 0
        %520 = vmatprep.subr.bf16.mxu0 0
        %521 = vmatpush2.bf16.msra.mxu0 0
        %522 = vmatprep.subr.bf16.mxu0 0
        %523 = vmatpush2.bf16.msra.mxu0 0
        %524 = vmatprep.mubr.bf16.mxu0 0
        %525 = vmatmul.mubr.bf16.gmra.mxu0 %v384
        %v526 = vpop.f32.mrf.mxu0
        %v527 = vadd.f32 0.0, %v526
        %v528 = vpop.f32.mrf.mxu0
        %v529 = vpop.f32.mrf.mxu0
        %v530 = vpop.f32.mrf.mxu0
        %531 = vdwg.mxu0
        %v532 = vpack.c.bf16 %v527, %v527
        %533 = vst.msk [vmem:[%s342] sm:$0xf] %vm428, %v532
        %s534 = sand.u32 %s161, 1
        %s535 = scalar_lea.sflag [#allocation3], %s534
        %s536 = sand.u32 %s161, 1
        %s537 = smul.addr %s536, 4
        %s538 = scalar_lea.vmem [#allocation2], %s537
        %s539 = sand.u32 %s24, 1
        %s540 = scalar_lea.sflag [#allocation5], %s539
        %s541 = sand.u32 %s191, 1
        %s542 = smul.addr %s541, 4
        %s543 = scalar_lea.vmem [#allocation4], %s542
        %s544 = sand.u32 %s24, 1
        %s545 = scalar_lea.sflag [#allocation5], %s544
        %s546 = sand.u32 %s221, 1
        %s547 = smul.addr %s546, 4
        %s548 = scalar_lea.vmem [#allocation6], %s547
        // Predicated region
        $region37: #{tpu_custom_call.1} parent=35 // pred_check
          %p549 = pneg %p171
        $region38: #{tpu_custom_call.1} parent=35 // pred_check_branch
          %551 = sbr.rel (%p549) target = $region40
        $region39: #{tpu_custom_call.1} parent=35 // pred_region
          %s553 = ssub.s32 64, 64
          %554 = vsyncadd %s535, %s553
          %s555 = sadd.s32 %s30, %s31
          %s556 = smul.addr %s29, 4
          %s557 = sadd.s32 %s555, %s556
          %s558 = smul.addr %s557, 64
          %s559 = scalar_lea.hbm %s4, %s558
          %s561 = sshll.u32 %s538, 4
          %s562 = int_to_ptr.vmem [resolvable:$true] %s561
          %564 = dma.vmem_to_hbm [thread:$0]  %s562, 64, %s559, %s535
        $region40: #{tpu_custom_call.1} parent=35 // pred_fallthru
          _
        // Predicated region
        $region41: #{tpu_custom_call.1} parent=35 // pred_check
          %p565 = pneg %p201
        $region42: #{tpu_custom_call.1} parent=35 // pred_check_branch
          %567 = sbr.rel (%p565) target = $region44
        $region43: #{tpu_custom_call.1} parent=35 // pred_region
          %s569 = ssub.s32 64, 64
          %570 = vsyncadd %s540, %s569
          %s571 = sadd.s32 %s30, %s31
          %s572 = smul.addr %s29, 4
          %s573 = sadd.s32 %s571, %s572
          %s574 = smul.addr %s573, 64
          %s575 = scalar_lea.hbm %s5, %s574
          %s577 = sshll.u32 %s543, 4
          %s578 = int_to_ptr.vmem [resolvable:$true] %s577
          %580 = dma.vmem_to_hbm [thread:$0]  %s578, 64, %s575, %s540
        $region44: #{tpu_custom_call.1} parent=35 // pred_fallthru
          _
        // Predicated region
        $region45: #{tpu_custom_call.1} parent=35 // pred_check
          %p581 = pneg %p231
        $region46: #{tpu_custom_call.1} parent=35 // pred_check_branch
          %583 = sbr.rel (%p581) target = $region48
        $region47: #{tpu_custom_call.1} parent=35 // pred_region
          %s585 = ssub.s32 64, 64
          %586 = vsyncadd %s545, %s585
          %s587 = sadd.s32 %s30, %s31
          %s588 = smul.addr %s29, 4
          %s589 = sadd.s32 %s587, %s588
          %s590 = smul.addr %s589, 64
          %s591 = scalar_lea.hbm %s6, %s590
          %s593 = sshll.u32 %s548, 4
          %s594 = int_to_ptr.vmem [resolvable:$true] %s593
          %596 = dma.vmem_to_hbm [thread:$0]  %s594, 64, %s591, %s545
        $region48: #{tpu_custom_call.1} parent=35 // pred_fallthru
          _
      $region36: #{tpu_custom_call.1} parent=5 // pred_fallthru
        _
      %p597 = scmp.le.s32.totalorder 2, %s19
      // Predicated region
      $region49: #{tpu_custom_call.1} parent=5 // pred_check
        %p598 = pneg %p597
      $region50: #{tpu_custom_call.1} parent=5 // pred_check_branch
        %600 = sbr.rel (%p598) target = $region52
      $region51: #{tpu_custom_call.1} parent=5 // pred_region
        %s601 = ssub.s32 %s19, 2
        // Predicated region
        $region53: #{tpu_custom_call.1} parent=51 // pred_check
          %p602 = pneg %p177
        $region54: #{tpu_custom_call.1} parent=51 // pred_check_branch
          %604 = sbr.rel (%p602) target = $region56
        $region55: #{tpu_custom_call.1} parent=51 // pred_region
          %s605 = sand.u32 %s162, 1
          %s606 = scalar_lea.sflag [#allocation3], %s605
          %s607 = sand.u32 %s162, 1
          %s608 = smul.addr %s607, 4
          %s609 = scalar_lea.vmem [#allocation2], %s608
          %610 = dma.done %s606, 64
        $region56: #{tpu_custom_call.1} parent=51 // pred_fallthru
          _
        // Predicated region
        $region57: #{tpu_custom_call.1} parent=51 // pred_check
          %p611 = pneg %p207
        $region58: #{tpu_custom_call.1} parent=51 // pred_check_branch
          %613 = sbr.rel (%p611) target = $region60
        $region59: #{tpu_custom_call.1} parent=51 // pred_region
          %s614 = sand.u32 %s25, 1
          %s615 = scalar_lea.sflag [#allocation5], %s614
          %s616 = sand.u32 %s192, 1
          %s617 = smul.addr %s616, 4
          %s618 = scalar_lea.vmem [#allocation4], %s617
          %619 = dma.done %s615, 64
        $region60: #{tpu_custom_call.1} parent=51 // pred_fallthru
          _
        // Predicated region
        $region61: #{tpu_custom_call.1} parent=51 // pred_check
          %p620 = pneg %p237
        $region62: #{tpu_custom_call.1} parent=51 // pred_check_branch
          %622 = sbr.rel (%p620) target = $region64
        $region63: #{tpu_custom_call.1} parent=51 // pred_region
          %s623 = sand.u32 %s25, 1
          %s624 = scalar_lea.sflag [#allocation5], %s623
          %s625 = sand.u32 %s222, 1
          %s626 = smul.addr %s625, 4
          %s627 = scalar_lea.vmem [#allocation6], %s626
          %628 = dma.done %s624, 64
        $region64: #{tpu_custom_call.1} parent=51 // pred_fallthru
          _
      $region52: #{tpu_custom_call.1} parent=5 // pred_fallthru
        _
    $region6: #{tpu_custom_call.1} parent=1 // loop_footer
      %s23 = sadd.s32 1, %s19
    $region7: #{tpu_custom_call.1} parent=1 // loop_footer_branch
      %18 = sbr.rel target = $region3
    $region8: #{tpu_custom_call.1} parent=1 // loop_exit
      _
    %629 = vsyncpa [#allocation3], 1
    %s630 = scalar_lea.sflag [#allocation3], 1
    %631 = vsyncpa %s630, 1
    %632 = vsyncpa [#allocation5], 1
    %s633 = scalar_lea.sflag [#allocation5], 1
    %634 = vsyncpa %s633, 1

</llo_original>
